<compile_context>
chip_gen: v5e
topology: v5e:2x2
jax: 0.10.0
libtpu: 0.0.40
codegen_flags: <defaults>
</compile_context>

<pallas_src>
import functools

import jax
import jax.numpy as jnp
from jax.experimental import pallas as pl
from jax.experimental.pallas import tpu as pltpu


def _fused_kernel(cols_ref, wmat_ref, bconv_ref, wcls_ref, bcls_ref, out_ref,
                  *, hw):
    """conv(as one matmul) + bias + ReLU + avg-pool(MXU) + linear, per sample.

    cols_ref  : [1, K*K*C_in, H*W]  im2col columns of this sample
    wmat_ref  : [C_out, K*K*C_in]   flattened conv weight (tap-major rows)
    bconv_ref : [C_out, 1]
    wcls_ref  : [NC, C_out]
    bcls_ref  : [NC, 1]
    out_ref   : [1, NC, 1]
    """
    hp = jax.lax.Precision.HIGHEST

    cols = cols_ref[0]                                       # [K*K*C_in, H*W]
    # Conv as a single MXU matmul (contraction depth K*K*C_in).
    h = jnp.dot(wmat_ref[...], cols,
                preferred_element_type=jnp.float32, precision=hp)  # [C_out, H*W]
    # Bias + ReLU, lane-dense (channels on sublanes, spatial on lanes).
    h = jnp.maximum(h + bconv_ref[...], 0.0)
    # Global average pool on the MXU: contract the H*W lane axis with a
    # constant 1/(H*W) column (all positions are valid -> no mask needed).
    inv_col = jnp.full((hw, 1), 1.0 / hw, dtype=jnp.float32)
    pooled = jnp.dot(h, inv_col,
                     preferred_element_type=jnp.float32, precision=hp)  # [C_out, 1]
    # Classifier, column orientation (no in-kernel transpose anywhere).
    logits = jnp.dot(wcls_ref[...], pooled,
                     preferred_element_type=jnp.float32, precision=hp)
    logits = logits + bcls_ref[...]                          # [NC, 1]
    out_ref[0] = logits.astype(out_ref.dtype)


def prepare_params(w_conv, b_conv, w_cls, b_cls):
    """One-time parameter re-layout (done at load time, NOT per forward)."""
    C_out, C_in, K, _ = w_conv.shape
    # Row ordering (kh, kw, c_in) matches the im2col built in combined_forward.
    w_mat = jnp.transpose(w_conv, (0, 2, 3, 1)).reshape(C_out, K * K * C_in)
    b_conv_col = b_conv.reshape(C_out, 1)
    b_cls_col = b_cls.reshape(-1, 1)
    return (w_mat, b_conv_col, w_cls, b_cls_col)


@jax.jit
def combined_forward(x, prepared):
    w_mat, b_conv_col, w_cls, b_cls_col = prepared
    N, C_in, H, W = x.shape
    C_out, KKC = w_mat.shape
    NC = w_cls.shape[0]
    K = int(round((KKC // C_in) ** 0.5))
    pad = (K - 1) // 2
    HW = H * W

    # Per-sample im2col: 9 static slices of the zero-padded input, stacked so
    # row index = (kh*K + kw)*C_in + c.  Only valid output positions are kept,
    # so no pool mask is needed later.  ~36 KiB/sample in f32.
    xp = jnp.pad(x, ((0, 0), (0, 0), (pad, pad), (pad, pad)))
    taps = [xp[:, :, kh:kh + H, kw:kw + W]
            for kh in range(K) for kw in range(K)]           # K*K x [N,C_in,H,W]
    cols = jnp.stack(taps, axis=1).reshape(N, KKC, HW)       # [N, K*K*C_in, H*W]

    kernel = functools.partial(_fused_kernel, hw=HW)
    out3 = pl.pallas_call(
        kernel,
        out_shape=jax.ShapeDtypeStruct((N, NC, 1), jnp.float32),
        grid=(N,),
        in_specs=[
            pl.BlockSpec((1, KKC, HW), lambda n: (n, 0, 0)),   # this sample's cols
            pl.BlockSpec((C_out, KKC), lambda n: (0, 0)),      # conv weight (resident)
            pl.BlockSpec((C_out, 1), lambda n: (0, 0)),        # conv bias
            pl.BlockSpec((NC, C_out), lambda n: (0, 0)),       # classifier weight
            pl.BlockSpec((NC, 1), lambda n: (0, 0)),           # classifier bias
        ],
        out_specs=pl.BlockSpec((1, NC, 1), lambda n: (n, 0, 0)),
        compiler_params=pltpu.CompilerParams(
            dimension_semantics=("parallel",)),                # v7x: 2 TCs share batch
    )(cols, w_mat, b_conv_col, w_cls, b_cls_col)
    return out3.reshape(N, NC)                                 # free squeeze of unit dim


def reference_forward(x, params):
    w_conv, b_conv, w_cls, b_cls = params
    y = jax.lax.conv_general_dilated(
        x, w_conv, window_strides=(1, 1), padding=((1, 1), (1, 1)),
        dimension_numbers=("NCHW", "OIHW", "NCHW"),
        precision=jax.lax.Precision.HIGHEST)
    y = jax.nn.relu(y + b_conv.reshape(1, -1, 1, 1))
    feat = jnp.mean(y, axis=(2, 3))
    return jnp.dot(feat, w_cls.T, precision=jax.lax.Precision.HIGHEST) + b_cls


if __name__ == "__main__":
    # Small shapes: batch=2, in_channels=4, spatial=16x16, conv_out=8, classes=10.
    N, C_in, H, W = 2, 4, 16, 16
    C_out, K, num_classes = 8, 3, 10

    key = jax.random.PRNGKey(0)
    kx, kw1, kb1, kw2, kb2 = jax.random.split(key, 5)

    x = jax.random.normal(kx, (N, C_in, H, W), dtype=jnp.float32)
    w_conv = 0.1 * jax.random.normal(kw1, (C_out, C_in, K, K), dtype=jnp.float32)
    b_conv = 0.1 * jax.random.normal(kb1, (C_out,), dtype=jnp.float32)
    w_cls = 0.1 * jax.random.normal(kw2, (num_classes, C_out), dtype=jnp.float32)
    b_cls = 0.1 * jax.random.normal(kb2, (num_classes,), dtype=jnp.float32)
    params = (w_conv, b_conv, w_cls, b_cls)

    prepared = prepare_params(*params)     # one-time re-layout, outside the jitted forward

    out = jax.block_until_ready(combined_forward(x, prepared))
    ref = jax.block_until_ready(reference_forward(x, params))

    assert out.shape == (N, num_classes)
    assert jnp.allclose(out, ref, atol=1e-4, rtol=1e-4), "mismatch vs reference"

    print("KERNEL_OK")
</pallas_src>

<mosaic_0001>
module attributes {stable_mosaic.version = 11 : i64} {
  func.func @_fused_kernel(%arg0: i32, %arg1: memref<1x36x256xf32, #tpu.memory_space<vmem>>, %arg2: memref<8x36xf32, #tpu.memory_space<vmem>>, %arg3: memref<8x1xf32, #tpu.memory_space<vmem>>, %arg4: memref<10x8xf32, #tpu.memory_space<vmem>>, %arg5: memref<10x1xf32, #tpu.memory_space<vmem>>, %arg6: memref<1x10x1xf32, #tpu.memory_space<vmem>>) attributes {dimension_semantics = [#tpu.dimension_semantics<parallel>], iteration_bounds = array<i64: 2>, scalar_prefetch = 0 : i64, scratch_operands = 0 : i64, tpu.core_type = #tpu.core_type<tc>, window_params = [{transform_indices = @transform_0, window_bounds = array<i64: 1, 36, 256>}, {pipeline_mode = #tpu.pipeline_mode<synchronous>, transform_indices = @transform_1, window_bounds = array<i64: 8, 36>}, {pipeline_mode = #tpu.pipeline_mode<synchronous>, transform_indices = @transform_2, window_bounds = array<i64: 8, 1>}, {pipeline_mode = #tpu.pipeline_mode<synchronous>, transform_indices = @transform_3, window_bounds = array<i64: 10, 8>}, {pipeline_mode = #tpu.pipeline_mode<synchronous>, transform_indices = @transform_4, window_bounds = array<i64: 10, 1>}, {transform_indices = @transform_5, window_bounds = array<i64: 1, 10, 1>}]} {
    %c0 = arith.constant 0 : index
    %c0_0 = arith.constant 0 : index
    %c0_1 = arith.constant 0 : index
    %0 = vector.load %arg1[%c0, %c0_0, %c0_1] : memref<1x36x256xf32, #tpu.memory_space<vmem>>, vector<1x36x256xf32>
    %1 = vector.shape_cast %0 : vector<1x36x256xf32> to vector<36x256xf32>
    %c0_2 = arith.constant 0 : index
    %c0_3 = arith.constant 0 : index
    %2 = vector.load %arg2[%c0_2, %c0_3] : memref<8x36xf32, #tpu.memory_space<vmem>>, vector<8x36xf32>
    %cst = arith.constant dense<0.000000e+00> : vector<8x256xf32>
    %3 = tpu.matmul %2, %1, %cst {dimension_numbers = #tpu.dot_dimension_numbers<[1], [0], [0], [1], [0, 0, 1, 1], [], []>, precision = #tpu.contract_precision<fp32>} : vector<8x36xf32>, vector<36x256xf32>, vector<8x256xf32> -> vector<8x256xf32>
    %c0_4 = arith.constant 0 : index
    %c0_5 = arith.constant 0 : index
    %4 = vector.load %arg3[%c0_4, %c0_5] : memref<8x1xf32, #tpu.memory_space<vmem>>, vector<8x1xf32>
    %5 = vector.broadcast %4 : vector<8x1xf32> to vector<8x256xf32>
    %6 = arith.addf %3, %5 : vector<8x256xf32>
    %cst_6 = arith.constant 0.000000e+00 : f32
    %7 = vector.broadcast %cst_6 : f32 to vector<8x256xf32>
    %8 = arith.maximumf %6, %7 : vector<8x256xf32>
    %cst_7 = arith.constant 3.906250e-03 : f32
    %9 = vector.broadcast %cst_7 : f32 to vector<256x1xf32>
    %cst_8 = arith.constant dense<0.000000e+00> : vector<8x1xf32>
    %10 = tpu.matmul %8, %9, %cst_8 {dimension_numbers = #tpu.dot_dimension_numbers<[1], [0], [0], [1], [0, 0, 1, 1], [], []>, precision = #tpu.contract_precision<fp32>} : vector<8x256xf32>, vector<256x1xf32>, vector<8x1xf32> -> vector<8x1xf32>
    %c0_9 = arith.constant 0 : index
    %c0_10 = arith.constant 0 : index
    %11 = vector.load %arg4[%c0_9, %c0_10] : memref<10x8xf32, #tpu.memory_space<vmem>>, vector<10x8xf32>
    %cst_11 = arith.constant dense<0.000000e+00> : vector<10x1xf32>
    %12 = tpu.matmul %11, %10, %cst_11 {dimension_numbers = #tpu.dot_dimension_numbers<[1], [0], [0], [1], [0, 0, 1, 1], [], []>, precision = #tpu.contract_precision<fp32>} : vector<10x8xf32>, vector<8x1xf32>, vector<10x1xf32> -> vector<10x1xf32>
    %c0_12 = arith.constant 0 : index
    %c0_13 = arith.constant 0 : index
    %13 = vector.load %arg5[%c0_12, %c0_13] : memref<10x1xf32, #tpu.memory_space<vmem>>, vector<10x1xf32>
    %14 = arith.addf %12, %13 : vector<10x1xf32>
    %c0_14 = arith.constant 0 : index
    %c0_15 = arith.constant 0 : index
    %c0_16 = arith.constant 0 : index
    %15 = vector.load %arg6[%c0_14, %c0_15, %c0_16] : memref<1x10x1xf32, #tpu.memory_space<vmem>>, vector<1x10x1xf32>
    %16 = vector.shape_cast %15 : vector<1x10x1xf32> to vector<10x1xf32>
    %17 = vector.shape_cast %14 : vector<10x1xf32> to vector<1x10x1xf32>
    tpu.vector_store %arg6[%c0_14, %c0_15, %c0_16], %17 {strides = array<i32>} : memref<1x10x1xf32, #tpu.memory_space<vmem>>, vector<1x10x1xf32>,
    return
  }
  func.func @transform_0(%arg0: i32) -> (i32, i32, i32) {
    %c0_i32 = arith.constant 0 : i32
    %c0_i32_0 = arith.constant 0 : i32
    %c0_i32_1 = arith.constant 0 : i32
    return %arg0, %c0_i32, %c0_i32_0 : i32, i32, i32
  }
  func.func @transform_1(%arg0: i32) -> (i32, i32) {
    %c0_i32 = arith.constant 0 : i32
    %c0_i32_0 = arith.constant 0 : i32
    %c0_i32_1 = arith.constant 0 : i32
    return %c0_i32, %c0_i32_0 : i32, i32
  }
  func.func @transform_2(%arg0: i32) -> (i32, i32) {
    %c0_i32 = arith.constant 0 : i32
    %c0_i32_0 = arith.constant 0 : i32
    %c0_i32_1 = arith.constant 0 : i32
    return %c0_i32, %c0_i32_0 : i32, i32
  }
  func.func @transform_3(%arg0: i32) -> (i32, i32) {
    %c0_i32 = arith.constant 0 : i32
    %c0_i32_0 = arith.constant 0 : i32
    %c0_i32_1 = arith.constant 0 : i32
    return %c0_i32, %c0_i32_0 : i32, i32
  }
  func.func @transform_4(%arg0: i32) -> (i32, i32) {
    %c0_i32 = arith.constant 0 : i32
    %c0_i32_0 = arith.constant 0 : i32
    %c0_i32_1 = arith.constant 0 : i32
    return %c0_i32, %c0_i32_0 : i32, i32
  }
  func.func @transform_5(%arg0: i32) -> (i32, i32, i32) {
    %c0_i32 = arith.constant 0 : i32
    %c0_i32_0 = arith.constant 0 : i32
    %c0_i32_1 = arith.constant 0 : i32
    return %arg0, %c0_i32, %c0_i32_0 : i32, i32, i32
  }
}

</mosaic_0001>

<llo_original>
// kernel: combined_forward.1
$region0: #{combined_forward.1}
  #allocation0 [shape = 'u32[]', space=smem, size = 0x4, offset = 0x4, fixed_abs, tag = 'smem constant byte address 0x4 - core index']
  #allocation1 [shape = 'u32[72,128]{1,0:T(1,128)}', space=vmem, size = 0x9000, scoped, tag = 'internal scratch']
  %s0 = inlined_call_operand.vmem [shape: f32[2,36,256], index: 0, kind: input, shape index: {}]
  %s1 = inlined_call_operand.vmem [shape: f32[8,36], index: 1, kind: input, shape index: {}]
  %s2 = inlined_call_operand.vmem [shape: f32[8,1], index: 2, kind: input, shape index: {}]
  %s3 = inlined_call_operand.vmem [shape: f32[10,8], index: 3, kind: input, shape index: {}]
  %s4 = inlined_call_operand.vmem [shape: f32[10,1], index: 4, kind: input, shape index: {}]
  %s5 = inlined_call_operand.vmem [shape: f32[2,10,1], index: 5, kind: output, shape index: {}]
  %s6 = sld [smem:[#allocation0]]
  $region53: #{combined_forward.1} parent=0
    _
  %s8 = ssub.s32 1, %s6
  %s9 = scalar_select 0, %s8, %s6
  loop: start=0, step=1, limit=4
  $region2: #{combined_forward.1} parent=0 // loop_pre_header
    _
  $region3: #{combined_forward.1} parent=0 // loop_header
    %s11 = sphi 0, %s15
    %p12 = scmp.ge.s32.totalorder %s11, 4
    %s21 = sphi 0, %s23
    %s24 = sphi 0, %s21
    %s25 = sphi 0, %s24
    %s41 = sphi 0, %s25
    %s45 = sphi 0, %s45
    %s47 = sphi 0, %s45
    %s48 = sphi 0, %s47
    %s62 = sphi 0, %s48
    %s66 = sphi 0, %s66
    %s68 = sphi 0, %s66
    %s69 = sphi 0, %s68
    %s83 = sphi 0, %s69
    %s87 = sphi 0, %s87
    %s89 = sphi 0, %s87
    %s90 = sphi 0, %s89
    %s104 = sphi 0, %s90
    %s108 = sphi 0, %s108
    %s110 = sphi 0, %s108
    %s111 = sphi 0, %s110
    %s125 = sphi 0, %s111
    %s131 = sphi 0, %s133
    %s134 = sphi 0, %s131
    %s135 = sphi 0, %s134
    %s151 = sphi 0, %s135
  $region4: #{combined_forward.1} parent=0 // loop_header_branch
    %14 = sbr.rel (%p12) target = $region8
  $region5: #{combined_forward.1} parent=0 // loop_body
    %s16 = ssub.s32 %s11, 1
    %s17 = ssub.s32 %s11, 2
    %s18 = sadd.s32 %s11, 1
    %s19 = ssub.s32 %s11, %s18
    %p20 = scmp.eq.s32.totalorder %s19, 0
    %s22 = sadd.s32 %s21, 1
    %s23 = scalar_select %p20, %s21, %s22
    %p26 = pneg %p20
    %p27 = scmp.eq.s32.totalorder %s11, 1
    %p28 = por %p26, %p27
    %p29 = scmp.ne.s32.totalorder %s21, %s24
    %p30 = scmp.eq.s32.totalorder %s11, 0
    %p31 = por %p29, %p30
    %p32 = scmp.ne.s32.totalorder %s21, %s24
    %p33 = scmp.eq.s32.totalorder %s16, 1
    %p34 = por %p32, %p33
    %p35 = scmp.ne.s32.totalorder %s24, %s25
    %p36 = scmp.eq.s32.totalorder %s16, 0
    %p37 = por %p35, %p36
    %p38 = scmp.ne.s32.totalorder %s24, %s25
    %p39 = scmp.eq.s32.totalorder %s17, 1
    %p40 = por %p38, %p39
    %p42 = scmp.ne.s32.totalorder %s25, %s41
    %p43 = scmp.eq.s32.totalorder %s17, 0
    %p44 = por %p42, %p43
    %s46 = sadd.s32 %s45, 1
    %p49 = scmp.eq.s32.totalorder %s11, 1
    %p50 = scmp.ne.s32.totalorder %s45, %s47
    %p51 = scmp.eq.s32.totalorder %s11, 0
    %p52 = por %p50, %p51
    %p53 = scmp.ne.s32.totalorder %s45, %s47
    %p54 = scmp.eq.s32.totalorder %s16, 1
    %p55 = por %p53, %p54
    %p56 = scmp.ne.s32.totalorder %s47, %s48
    %p57 = scmp.eq.s32.totalorder %s16, 0
    %p58 = por %p56, %p57
    %p59 = scmp.ne.s32.totalorder %s47, %s48
    %p60 = scmp.eq.s32.totalorder %s17, 1
    %p61 = por %p59, %p60
    %p63 = scmp.ne.s32.totalorder %s48, %s62
    %p64 = scmp.eq.s32.totalorder %s17, 0
    %p65 = por %p63, %p64
    %s67 = sadd.s32 %s66, 1
    %p70 = scmp.eq.s32.totalorder %s11, 1
    %p71 = scmp.ne.s32.totalorder %s66, %s68
    %p72 = scmp.eq.s32.totalorder %s11, 0
    %p73 = por %p71, %p72
    %p74 = scmp.ne.s32.totalorder %s66, %s68
    %p75 = scmp.eq.s32.totalorder %s16, 1
    %p76 = por %p74, %p75
    %p77 = scmp.ne.s32.totalorder %s68, %s69
    %p78 = scmp.eq.s32.totalorder %s16, 0
    %p79 = por %p77, %p78
    %p80 = scmp.ne.s32.totalorder %s68, %s69
    %p81 = scmp.eq.s32.totalorder %s17, 1
    %p82 = por %p80, %p81
    %p84 = scmp.ne.s32.totalorder %s69, %s83
    %p85 = scmp.eq.s32.totalorder %s17, 0
    %p86 = por %p84, %p85
    %s88 = sadd.s32 %s87, 1
    %p91 = scmp.eq.s32.totalorder %s11, 1
    %p92 = scmp.ne.s32.totalorder %s87, %s89
    %p93 = scmp.eq.s32.totalorder %s11, 0
    %p94 = por %p92, %p93
    %p95 = scmp.ne.s32.totalorder %s87, %s89
    %p96 = scmp.eq.s32.totalorder %s16, 1
    %p97 = por %p95, %p96
    %p98 = scmp.ne.s32.totalorder %s89, %s90
    %p99 = scmp.eq.s32.totalorder %s16, 0
    %p100 = por %p98, %p99
    %p101 = scmp.ne.s32.totalorder %s89, %s90
    %p102 = scmp.eq.s32.totalorder %s17, 1
    %p103 = por %p101, %p102
    %p105 = scmp.ne.s32.totalorder %s90, %s104
    %p106 = scmp.eq.s32.totalorder %s17, 0
    %p107 = por %p105, %p106
    %s109 = sadd.s32 %s108, 1
    %p112 = scmp.eq.s32.totalorder %s11, 1
    %p113 = scmp.ne.s32.totalorder %s108, %s110
    %p114 = scmp.eq.s32.totalorder %s11, 0
    %p115 = por %p113, %p114
    %p116 = scmp.ne.s32.totalorder %s108, %s110
    %p117 = scmp.eq.s32.totalorder %s16, 1
    %p118 = por %p116, %p117
    %p119 = scmp.ne.s32.totalorder %s110, %s111
    %p120 = scmp.eq.s32.totalorder %s16, 0
    %p121 = por %p119, %p120
    %p122 = scmp.ne.s32.totalorder %s110, %s111
    %p123 = scmp.eq.s32.totalorder %s17, 1
    %p124 = por %p122, %p123
    %p126 = scmp.ne.s32.totalorder %s111, %s125
    %p127 = scmp.eq.s32.totalorder %s17, 0
    %p128 = por %p126, %p127
    %s129 = ssub.s32 %s11, %s18
    %p130 = scmp.eq.s32.totalorder %s129, 0
    %s132 = sadd.s32 %s131, 1
    %s133 = scalar_select %p130, %s131, %s132
    %p136 = pneg %p130
    %p137 = scmp.eq.s32.totalorder %s11, 1
    %p138 = por %p136, %p137
    %p139 = scmp.ne.s32.totalorder %s131, %s134
    %p140 = scmp.eq.s32.totalorder %s11, 0
    %p141 = por %p139, %p140
    %p142 = scmp.ne.s32.totalorder %s131, %s134
    %p143 = scmp.eq.s32.totalorder %s16, 1
    %p144 = por %p142, %p143
    %p145 = scmp.ne.s32.totalorder %s134, %s135
    %p146 = scmp.eq.s32.totalorder %s16, 0
    %p147 = por %p145, %p146
    %p148 = scmp.ne.s32.totalorder %s134, %s135
    %p149 = scmp.eq.s32.totalorder %s17, 1
    %p150 = por %p148, %p149
    %p152 = scmp.ne.s32.totalorder %s135, %s151
    %p153 = scmp.eq.s32.totalorder %s17, 0
    %p154 = por %p152, %p153
    %p155 = scmp.le.s32.totalorder 1, %s11
    %p156 = scmp.lt.s32.totalorder %s11, 3
    %p157 = pnand %p155, %p156
    %p158 = pneg %p157
    // Predicated region
    $region9: #{combined_forward.1} parent=5 // pred_check
      _
    $region10: #{combined_forward.1} parent=5 // pred_check_branch
      %160 = sbr.rel (%p157) target = $region12
    $region11: #{combined_forward.1} parent=5 // pred_region
      %s161 = ssub.s32 %s11, 1
      // Predicated region
      $region13: #{combined_forward.1} parent=11 // pred_check
        %p162 = pneg %p58
      $region14: #{combined_forward.1} parent=11 // pred_check_branch
        %164 = sbr.rel (%p162) target = $region16
      $region15: #{combined_forward.1} parent=11 // pred_region
        _
      $region16: #{combined_forward.1} parent=11 // pred_fallthru
        _
      // Predicated region
      $region17: #{combined_forward.1} parent=11 // pred_check
        %p165 = pneg %p79
      $region18: #{combined_forward.1} parent=11 // pred_check_branch
        %167 = sbr.rel (%p165) target = $region20
      $region19: #{combined_forward.1} parent=11 // pred_region
        _
      $region20: #{combined_forward.1} parent=11 // pred_fallthru
        _
      // Predicated region
      $region21: #{combined_forward.1} parent=11 // pred_check
        %p168 = pneg %p100
      $region22: #{combined_forward.1} parent=11 // pred_check_branch
        %170 = sbr.rel (%p168) target = $region24
      $region23: #{combined_forward.1} parent=11 // pred_region
        _
      $region24: #{combined_forward.1} parent=11 // pred_fallthru
        _
      // Predicated region
      $region25: #{combined_forward.1} parent=11 // pred_check
        %p171 = pneg %p121
      $region26: #{combined_forward.1} parent=11 // pred_check_branch
        %173 = sbr.rel (%p171) target = $region28
      $region27: #{combined_forward.1} parent=11 // pred_region
        _
      $region28: #{combined_forward.1} parent=11 // pred_fallthru
        _
    $region12: #{combined_forward.1} parent=5 // pred_fallthru
      _
    %p174 = scmp.lt.s32.totalorder %s11, 2
    // Predicated region
    $region29: #{combined_forward.1} parent=5 // pred_check
      %p175 = pneg %p174
    $region30: #{combined_forward.1} parent=5 // pred_check_branch
      %177 = sbr.rel (%p175) target = $region32
    $region31: #{combined_forward.1} parent=5 // pred_region
      // Predicated region
      $region33: #{combined_forward.1} parent=31 // pred_check
        %p178 = pneg %p31
      $region34: #{combined_forward.1} parent=31 // pred_check_branch
        %180 = sbr.rel (%p178) target = $region36
      $region35: #{combined_forward.1} parent=31 // pred_region
        %p181 = scmp.lt.s32.totalorder %s11, 1
        %s182 = scalar_select %p181, %s11, 1
        %s183 = smul.addr %s182, 10
        %s184 = smul.addr %s183, 8
        %s185 = scalar_lea.vmem %s0, %s184
      $region36: #{combined_forward.1} parent=31 // pred_fallthru
        _
    $region32: #{combined_forward.1} parent=5 // pred_fallthru
      _
    %p186 = scmp.le.s32.totalorder 1, %s11
    %p187 = scmp.lt.s32.totalorder %s11, 3
    %p188 = pnand %p186, %p187
    %p189 = pneg %p188
    // Predicated region
    $region37: #{combined_forward.1} parent=5 // pred_check
      _
    $region38: #{combined_forward.1} parent=5 // pred_check_branch
      %191 = sbr.rel (%p188) target = $region40
    $region39: #{combined_forward.1} parent=5 // pred_region
      %s192 = ssub.s32 %s11, 1
      %p193 = scmp.lt.s32.totalorder %s16, 1
      %s194 = scalar_select %p193, %s16, 1
      %s195 = smul.addr %s194, 10
      %s196 = smul.addr %s195, 8
      %s197 = scalar_lea.vmem %s0, %s196
      %p198 = pneg %p37
      %p199 = pneg %p34
      %p200 = pneg %p58
      %p201 = pneg %p55
      %p202 = pneg %p79
      %p203 = pneg %p76
      %p204 = pneg %p100
      %p205 = pneg %p97
      %p206 = pneg %p121
      %p207 = pneg %p118
      %p208 = pneg %p147
      %p209 = pneg %p144
      %p210 = scmp.lt.s32.totalorder %s16, 1
      %s211 = scalar_select %p210, %s16, 1
      %s212 = smul.addr %s211, 2
      %s213 = smul.addr %s212, 8
      %s214 = scalar_lea.vmem %s5, %s213
      %p215 = scmp.lt.s32.totalorder %s16, 1
      %s216 = scalar_select %p215, %s16, 1
      %s217 = smul.addr %s216, 10
      %s218 = smul.addr %s217, 8
      %s219 = scalar_lea.vmem %s0, %s218
      %p220 = scmp.lt.s32.totalorder %s16, 1
      %s221 = scalar_select %p220, %s16, 1
      %s222 = smul.addr %s221, 2
      %s223 = smul.addr %s222, 8
      %s224 = scalar_lea.vmem %s5, %s223
      %v225 = vld [vmem:[%s219] sm:$0xff]
      %v226 = vld [vmem:[%s219 + $0x8] sm:$0xff]
      %v227 = vld [vmem:[%s219 + $0x10] sm:$0xff]
      %v228 = vld [vmem:[%s219 + $0x18] sm:$0xff]
      %v229 = vld [vmem:[%s219 + $0x20] sm:$0xff]
      %v230 = vld [vmem:[%s219 + $0x28] sm:$0xff]
      %v231 = vld [vmem:[%s219 + $0x30] sm:$0xff]
      %v232 = vld [vmem:[%s219 + $0x38] sm:$0xff]
      %v233 = vld [vmem:[%s219 + $0x40] sm:$0xf]
      %v234 = vld [vmem:[%s219 + $0x48] sm:$0xf]
      %v235 = vld [vmem:[%s1] sm:$0xff]
      %v236 = vld [vmem:[%s2] sm:$0xff]
      %238 = vset.pattern.permute.xlu0 0
      %239 = vperm.xlu0 %238, %v236
      %v240 = vpop.permute.xlu0 %239
      %vm242 = vcmask 293888
      %v244 = vsel %vm242, %v235, 0
      %vm246 = vcmask 1043456
      %v248 = vsel %vm246, %v233, 0
      %v251 = vsel %vm246, %v234, 0
      %253 = vmatpush.msra.mxu0 0.0
      %254 = vmatpush.msra.mxu0 0.0
      %255 = vmatpush.msra.mxu0 0.0
      %256 = vmatpush.msra.mxu0 0.0
      %257 = vmatpush.msra.mxu0 0.0
      %258 = vmatpush.msra.mxu0 0.0
      %259 = vmatpush.msra.mxu0 0.0
      %260 = vmatpush.msra.mxu0 0.0
      %261 = vmatpush.msra.mxu0 0.0
      %262 = vmatpush.msra.mxu0 0.0
      %263 = vmatpush.msra.mxu0 0.0
      %v264 = vand.u32 %v248, 4294901760
      %265 = vmatpush.msra.mxu0 %v264
      %v266 = vand.u32 %v231, 4294901760
      %267 = vmatpush.msra.mxu0 %v266
      %v268 = vand.u32 %v229, 4294901760
      %269 = vmatpush.msra.mxu0 %v268
      %v270 = vand.u32 %v227, 4294901760
      %271 = vmatpush.msra.mxu0 %v270
      %v272 = vand.u32 %v225, 4294901760
      %273 = vmatpush.msra.mxu0 %v272
      %v274 = vand.u32 %v244, 4294901760
      %v275 = vsub.f32 %v244, %v274
      %v276 = vand.u32 %v275, 4294901760
      %v277 = vsub.f32 %v275, %v276
      %v278 = vand.u32 %v277, 4294901760
      %279 = vmatmul.f32.gmra.mxu0 %v278
      %v280 = vpop.f32.mrf.mxu0
      %v281 = vadd.f32 %v240, %v280
      %282 = vdwg.mxu0
      %283 = vmatpush.msra.mxu0 0.0
      %284 = vmatpush.msra.mxu0 0.0
      %285 = vmatpush.msra.mxu0 0.0
      %286 = vmatpush.msra.mxu0 0.0
      %287 = vmatpush.msra.mxu0 0.0
      %288 = vmatpush.msra.mxu0 0.0
      %289 = vmatpush.msra.mxu0 0.0
      %290 = vmatpush.msra.mxu0 0.0
      %291 = vmatpush.msra.mxu0 0.0
      %292 = vmatpush.msra.mxu0 0.0
      %293 = vmatpush.msra.mxu0 0.0
      %v294 = vand.u32 %v248, 4294901760
      %v295 = vsub.f32 %v248, %v294
      %v296 = vand.u32 %v295, 4294901760
      %v297 = vsub.f32 %v295, %v296
      %v298 = vand.u32 %v297, 4294901760
      %299 = vmatpush.msra.mxu0 %v298
      %v300 = vand.u32 %v231, 4294901760
      %v301 = vsub.f32 %v231, %v300
      %v302 = vand.u32 %v301, 4294901760
      %v303 = vsub.f32 %v301, %v302
      %v304 = vand.u32 %v303, 4294901760
      %305 = vmatpush.msra.mxu0 %v304
      %v306 = vand.u32 %v229, 4294901760
      %v307 = vsub.f32 %v229, %v306
      %v308 = vand.u32 %v307, 4294901760
      %v309 = vsub.f32 %v307, %v308
      %v310 = vand.u32 %v309, 4294901760
      %311 = vmatpush.msra.mxu0 %v310
      %v312 = vand.u32 %v227, 4294901760
      %v313 = vsub.f32 %v227, %v312
      %v314 = vand.u32 %v313, 4294901760
      %v315 = vsub.f32 %v313, %v314
      %v316 = vand.u32 %v315, 4294901760
      %317 = vmatpush.msra.mxu0 %v316
      %v318 = vand.u32 %v225, 4294901760
      %v319 = vsub.f32 %v225, %v318
      %v320 = vand.u32 %v319, 4294901760
      %v321 = vsub.f32 %v319, %v320
      %v322 = vand.u32 %v321, 4294901760
      %323 = vmatpush.msra.mxu0 %v322
      %v324 = vand.u32 %v244, 4294901760
      %325 = vmatmul.f32.gmra.mxu0 %v324
      %v326 = vpop.f32.mrf.mxu0
      %v327 = vadd.f32 %v281, %v326
      %328 = vdwg.mxu0
      %329 = vmatpush.msra.mxu0 0.0
      %330 = vmatpush.msra.mxu0 0.0
      %331 = vmatpush.msra.mxu0 0.0
      %332 = vmatpush.msra.mxu0 0.0
      %333 = vmatpush.msra.mxu0 0.0
      %334 = vmatpush.msra.mxu0 0.0
      %335 = vmatpush.msra.mxu0 0.0
      %336 = vmatpush.msra.mxu0 0.0
      %337 = vmatpush.msra.mxu0 0.0
      %338 = vmatpush.msra.mxu0 0.0
      %339 = vmatpush.msra.mxu0 0.0
      %v340 = vand.u32 %v248, 4294901760
      %v341 = vsub.f32 %v248, %v340
      %342 = vmatpush.msra.mxu0 %v341
      %v343 = vand.u32 %v231, 4294901760
      %v344 = vsub.f32 %v231, %v343
      %345 = vmatpush.msra.mxu0 %v344
      %v346 = vand.u32 %v229, 4294901760
      %v347 = vsub.f32 %v229, %v346
      %348 = vmatpush.msra.mxu0 %v347
      %v349 = vand.u32 %v227, 4294901760
      %v350 = vsub.f32 %v227, %v349
      %351 = vmatpush.msra.mxu0 %v350
      %v352 = vand.u32 %v225, 4294901760
      %v353 = vsub.f32 %v225, %v352
      %354 = vmatpush.msra.mxu0 %v353
      %v355 = vand.u32 %v244, 4294901760
      %v356 = vsub.f32 %v244, %v355
      %357 = vmatmul.f32.gmra.mxu0 %v356
      %v358 = vpop.f32.mrf.mxu0
      %v359 = vadd.f32 %v327, %v358
      %360 = vdwg.mxu0
      %361 = vmatpush.msra.mxu0 0.0
      %362 = vmatpush.msra.mxu0 0.0
      %363 = vmatpush.msra.mxu0 0.0
      %364 = vmatpush.msra.mxu0 0.0
      %365 = vmatpush.msra.mxu0 0.0
      %366 = vmatpush.msra.mxu0 0.0
      %367 = vmatpush.msra.mxu0 0.0
      %368 = vmatpush.msra.mxu0 0.0
      %369 = vmatpush.msra.mxu0 0.0
      %370 = vmatpush.msra.mxu0 0.0
      %371 = vmatpush.msra.mxu0 0.0
      %v372 = vand.u32 %v248, 4294901760
      %373 = vmatpush.msra.mxu0 %v372
      %v374 = vand.u32 %v231, 4294901760
      %375 = vmatpush.msra.mxu0 %v374
      %v376 = vand.u32 %v229, 4294901760
      %377 = vmatpush.msra.mxu0 %v376
      %v378 = vand.u32 %v227, 4294901760
      %379 = vmatpush.msra.mxu0 %v378
      %v380 = vand.u32 %v225, 4294901760
      %381 = vmatpush.msra.mxu0 %v380
      %v382 = vand.u32 %v244, 4294901760
      %v383 = vsub.f32 %v244, %v382
      %v384 = vand.u32 %v383, 4294901760
      %385 = vmatmul.f32.gmra.mxu0 %v384
      %v386 = vpop.f32.mrf.mxu0
      %v387 = vadd.f32 %v359, %v386
      %388 = vdwg.mxu0
      %389 = vmatpush.msra.mxu0 0.0
      %390 = vmatpush.msra.mxu0 0.0
      %391 = vmatpush.msra.mxu0 0.0
      %392 = vmatpush.msra.mxu0 0.0
      %393 = vmatpush.msra.mxu0 0.0
      %394 = vmatpush.msra.mxu0 0.0
      %395 = vmatpush.msra.mxu0 0.0
      %396 = vmatpush.msra.mxu0 0.0
      %397 = vmatpush.msra.mxu0 0.0
      %398 = vmatpush.msra.mxu0 0.0
      %399 = vmatpush.msra.mxu0 0.0
      %v400 = vand.u32 %v248, 4294901760
      %v401 = vsub.f32 %v248, %v400
      %v402 = vand.u32 %v401, 4294901760
      %403 = vmatpush.msra.mxu0 %v402
      %v404 = vand.u32 %v231, 4294901760
      %v405 = vsub.f32 %v231, %v404
      %v406 = vand.u32 %v405, 4294901760
      %407 = vmatpush.msra.mxu0 %v406
      %v408 = vand.u32 %v229, 4294901760
      %v409 = vsub.f32 %v229, %v408
      %v410 = vand.u32 %v409, 4294901760
      %411 = vmatpush.msra.mxu0 %v410
      %v412 = vand.u32 %v227, 4294901760
      %v413 = vsub.f32 %v227, %v412
      %v414 = vand.u32 %v413, 4294901760
      %415 = vmatpush.msra.mxu0 %v414
      %v416 = vand.u32 %v225, 4294901760
      %v417 = vsub.f32 %v225, %v416
      %v418 = vand.u32 %v417, 4294901760
      %419 = vmatpush.msra.mxu0 %v418
      %v420 = vand.u32 %v244, 4294901760
      %421 = vmatmul.f32.gmra.mxu0 %v420
      %v422 = vpop.f32.mrf.mxu0
      %v423 = vadd.f32 %v387, %v422
      %424 = vdwg.mxu0
      %425 = vmatpush.msra.mxu0 0.0
      %426 = vmatpush.msra.mxu0 0.0
      %427 = vmatpush.msra.mxu0 0.0
      %428 = vmatpush.msra.mxu0 0.0
      %429 = vmatpush.msra.mxu0 0.0
      %430 = vmatpush.msra.mxu0 0.0
      %431 = vmatpush.msra.mxu0 0.0
      %432 = vmatpush.msra.mxu0 0.0
      %433 = vmatpush.msra.mxu0 0.0
      %434 = vmatpush.msra.mxu0 0.0
      %435 = vmatpush.msra.mxu0 0.0
      %v436 = vand.u32 %v248, 4294901760
      %437 = vmatpush.msra.mxu0 %v436
      %v438 = vand.u32 %v231, 4294901760
      %439 = vmatpush.msra.mxu0 %v438
      %v440 = vand.u32 %v229, 4294901760
      %441 = vmatpush.msra.mxu0 %v440
      %v442 = vand.u32 %v227, 4294901760
      %443 = vmatpush.msra.mxu0 %v442
      %v444 = vand.u32 %v225, 4294901760
      %445 = vmatpush.msra.mxu0 %v444
      %v446 = vand.u32 %v244, 4294901760
      %447 = vmatmul.f32.gmra.mxu0 %v446
      %v448 = vpop.f32.mrf.mxu0
      %v449 = vadd.f32 %v423, %v448
      %450 = vdwg.mxu0
      %451 = vmatpush.msra.mxu0 0.0
      %452 = vmatpush.msra.mxu0 0.0
      %453 = vmatpush.msra.mxu0 0.0
      %454 = vmatpush.msra.mxu0 0.0
      %455 = vmatpush.msra.mxu0 0.0
      %456 = vmatpush.msra.mxu0 0.0
      %457 = vmatpush.msra.mxu0 0.0
      %458 = vmatpush.msra.mxu0 0.0
      %459 = vmatpush.msra.mxu0 0.0
      %460 = vmatpush.msra.mxu0 0.0
      %461 = vmatpush.msra.mxu0 0.0
      %v462 = vand.u32 %v251, 4294901760
      %463 = vmatpush.msra.mxu0 %v462
      %v464 = vand.u32 %v232, 4294901760
      %465 = vmatpush.msra.mxu0 %v464
      %v466 = vand.u32 %v230, 4294901760
      %467 = vmatpush.msra.mxu0 %v466
      %v468 = vand.u32 %v228, 4294901760
      %469 = vmatpush.msra.mxu0 %v468
      %v470 = vand.u32 %v226, 4294901760
      %471 = vmatpush.msra.mxu0 %v470
      %v472 = vand.u32 %v244, 4294901760
      %v473 = vsub.f32 %v244, %v472
      %v474 = vand.u32 %v473, 4294901760
      %v475 = vsub.f32 %v473, %v474
      %v476 = vand.u32 %v475, 4294901760
      %477 = vmatmul.f32.gmra.mxu0 %v476
      %v478 = vpop.f32.mrf.mxu0
      %v479 = vadd.f32 %v240, %v478
      %480 = vdwg.mxu0
      %481 = vmatpush.msra.mxu0 0.0
      %482 = vmatpush.msra.mxu0 0.0
      %483 = vmatpush.msra.mxu0 0.0
      %484 = vmatpush.msra.mxu0 0.0
      %485 = vmatpush.msra.mxu0 0.0
      %486 = vmatpush.msra.mxu0 0.0
      %487 = vmatpush.msra.mxu0 0.0
      %488 = vmatpush.msra.mxu0 0.0
      %489 = vmatpush.msra.mxu0 0.0
      %490 = vmatpush.msra.mxu0 0.0
      %491 = vmatpush.msra.mxu0 0.0
      %v492 = vand.u32 %v251, 4294901760
      %v493 = vsub.f32 %v251, %v492
      %v494 = vand.u32 %v493, 4294901760
      %v495 = vsub.f32 %v493, %v494
      %v496 = vand.u32 %v495, 4294901760
      %497 = vmatpush.msra.mxu0 %v496
      %v498 = vand.u32 %v232, 4294901760
      %v499 = vsub.f32 %v232, %v498
      %v500 = vand.u32 %v499, 4294901760
      %v501 = vsub.f32 %v499, %v500
      %v502 = vand.u32 %v501, 4294901760
      %503 = vmatpush.msra.mxu0 %v502
      %v504 = vand.u32 %v230, 4294901760
      %v505 = vsub.f32 %v230, %v504
      %v506 = vand.u32 %v505, 4294901760
      %v507 = vsub.f32 %v505, %v506
      %v508 = vand.u32 %v507, 4294901760
      %509 = vmatpush.msra.mxu0 %v508
      %v510 = vand.u32 %v228, 4294901760
      %v511 = vsub.f32 %v228, %v510
      %v512 = vand.u32 %v511, 4294901760
      %v513 = vsub.f32 %v511, %v512
      %v514 = vand.u32 %v513, 4294901760
      %515 = vmatpush.msra.mxu0 %v514
      %v516 = vand.u32 %v226, 4294901760
      %v517 = vsub.f32 %v226, %v516
      %v518 = vand.u32 %v517, 4294901760
      %v519 = vsub.f32 %v517, %v518
      %v520 = vand.u32 %v519, 4294901760
      %521 = vmatpush.msra.mxu0 %v520
      %v522 = vand.u32 %v244, 4294901760
      %523 = vmatmul.f32.gmra.mxu0 %v522
      %v524 = vpop.f32.mrf.mxu0
      %v525 = vadd.f32 %v479, %v524
      %526 = vdwg.mxu0
      %527 = vmatpush.msra.mxu0 0.0
      %528 = vmatpush.msra.mxu0 0.0
      %529 = vmatpush.msra.mxu0 0.0
      %530 = vmatpush.msra.mxu0 0.0
      %531 = vmatpush.msra.mxu0 0.0
      %532 = vmatpush.msra.mxu0 0.0
      %533 = vmatpush.msra.mxu0 0.0
      %534 = vmatpush.msra.mxu0 0.0
      %535 = vmatpush.msra.mxu0 0.0
      %536 = vmatpush.msra.mxu0 0.0
      %537 = vmatpush.msra.mxu0 0.0
      %v538 = vand.u32 %v251, 4294901760
      %v539 = vsub.f32 %v251, %v538
      %540 = vmatpush.msra.mxu0 %v539
      %v541 = vand.u32 %v232, 4294901760
      %v542 = vsub.f32 %v232, %v541
      %543 = vmatpush.msra.mxu0 %v542
      %v544 = vand.u32 %v230, 4294901760
      %v545 = vsub.f32 %v230, %v544
      %546 = vmatpush.msra.mxu0 %v545
      %v547 = vand.u32 %v228, 4294901760
      %v548 = vsub.f32 %v228, %v547
      %549 = vmatpush.msra.mxu0 %v548
      %v550 = vand.u32 %v226, 4294901760
      %v551 = vsub.f32 %v226, %v550
      %552 = vmatpush.msra.mxu0 %v551
      %v553 = vand.u32 %v244, 4294901760
      %v554 = vsub.f32 %v244, %v553
      %555 = vmatmul.f32.gmra.mxu0 %v554
      %v556 = vpop.f32.mrf.mxu0
      %v557 = vadd.f32 %v525, %v556
      %558 = vdwg.mxu0
      %559 = vmatpush.msra.mxu0 0.0
      %560 = vmatpush.msra.mxu0 0.0
      %561 = vmatpush.msra.mxu0 0.0
      %562 = vmatpush.msra.mxu0 0.0
      %563 = vmatpush.msra.mxu0 0.0
      %564 = vmatpush.msra.mxu0 0.0
      %565 = vmatpush.msra.mxu0 0.0
      %566 = vmatpush.msra.mxu0 0.0
      %567 = vmatpush.msra.mxu0 0.0
      %568 = vmatpush.msra.mxu0 0.0
      %569 = vmatpush.msra.mxu0 0.0
      %v570 = vand.u32 %v251, 4294901760
      %571 = vmatpush.msra.mxu0 %v570
      %v572 = vand.u32 %v232, 4294901760
      %573 = vmatpush.msra.mxu0 %v572
      %v574 = vand.u32 %v230, 4294901760
      %575 = vmatpush.msra.mxu0 %v574
      %v576 = vand.u32 %v228, 4294901760
      %577 = vmatpush.msra.mxu0 %v576
      %v578 = vand.u32 %v226, 4294901760
      %579 = vmatpush.msra.mxu0 %v578
      %v580 = vand.u32 %v244, 4294901760
      %v581 = vsub.f32 %v244, %v580
      %v582 = vand.u32 %v581, 4294901760
      %583 = vmatmul.f32.gmra.mxu0 %v582
      %v584 = vpop.f32.mrf.mxu0
      %v585 = vadd.f32 %v557, %v584
      %586 = vdwg.mxu0
      %587 = vmatpush.msra.mxu0 0.0
      %588 = vmatpush.msra.mxu0 0.0
      %589 = vmatpush.msra.mxu0 0.0
      %590 = vmatpush.msra.mxu0 0.0
      %591 = vmatpush.msra.mxu0 0.0
      %592 = vmatpush.msra.mxu0 0.0
      %593 = vmatpush.msra.mxu0 0.0
      %594 = vmatpush.msra.mxu0 0.0
      %595 = vmatpush.msra.mxu0 0.0
      %596 = vmatpush.msra.mxu0 0.0
      %597 = vmatpush.msra.mxu0 0.0
      %v598 = vand.u32 %v251, 4294901760
      %v599 = vsub.f32 %v251, %v598
      %v600 = vand.u32 %v599, 4294901760
      %601 = vmatpush.msra.mxu0 %v600
      %v602 = vand.u32 %v232, 4294901760
      %v603 = vsub.f32 %v232, %v602
      %v604 = vand.u32 %v603, 4294901760
      %605 = vmatpush.msra.mxu0 %v604
      %v606 = vand.u32 %v230, 4294901760
      %v607 = vsub.f32 %v230, %v606
      %v608 = vand.u32 %v607, 4294901760
      %609 = vmatpush.msra.mxu0 %v608
      %v610 = vand.u32 %v228, 4294901760
      %v611 = vsub.f32 %v228, %v610
      %v612 = vand.u32 %v611, 4294901760
      %613 = vmatpush.msra.mxu0 %v612
      %v614 = vand.u32 %v226, 4294901760
      %v615 = vsub.f32 %v226, %v614
      %v616 = vand.u32 %v615, 4294901760
      %617 = vmatpush.msra.mxu0 %v616
      %v618 = vand.u32 %v244, 4294901760
      %619 = vmatmul.f32.gmra.mxu0 %v618
      %v620 = vpop.f32.mrf.mxu0
      %v621 = vadd.f32 %v585, %v620
      %622 = vdwg.mxu0
      %623 = vmatpush.msra.mxu0 0.0
      %624 = vmatpush.msra.mxu0 0.0
      %625 = vmatpush.msra.mxu0 0.0
      %626 = vmatpush.msra.mxu0 0.0
      %627 = vmatpush.msra.mxu0 0.0
      %628 = vmatpush.msra.mxu0 0.0
      %629 = vmatpush.msra.mxu0 0.0
      %630 = vmatpush.msra.mxu0 0.0
      %631 = vmatpush.msra.mxu0 0.0
      %632 = vmatpush.msra.mxu0 0.0
      %633 = vmatpush.msra.mxu0 0.0
      %v634 = vand.u32 %v251, 4294901760
      %635 = vmatpush.msra.mxu0 %v634
      %v636 = vand.u32 %v232, 4294901760
      %637 = vmatpush.msra.mxu0 %v636
      %v638 = vand.u32 %v230, 4294901760
      %639 = vmatpush.msra.mxu0 %v638
      %v640 = vand.u32 %v228, 4294901760
      %641 = vmatpush.msra.mxu0 %v640
      %v642 = vand.u32 %v226, 4294901760
      %643 = vmatpush.msra.mxu0 %v642
      %v644 = vand.u32 %v244, 4294901760
      %645 = vmatmul.f32.gmra.mxu0 %v644
      %v646 = vpop.f32.mrf.mxu0
      %v647 = vadd.f32 %v621, %v646
      %648 = vdwg.mxu0
      %v649 = vmax.f32 %v449, 0.0
      %v650 = vmax.f32 %v647, 0.0
      %651 = vmatpush.msra.mxu0 0.00390625
      %652 = vmatpush.msra.mxu0 0.00390625
      %653 = vmatpush.msra.mxu0 0.00390625
      %654 = vmatpush.msra.mxu0 0.00390625
      %655 = vmatpush.msra.mxu0 0.00390625
      %656 = vmatpush.msra.mxu0 0.00390625
      %657 = vmatpush.msra.mxu0 0.00390625
      %658 = vmatpush.msra.mxu0 0.00390625
      %659 = vmatpush.msra.mxu0 0.00390625
      %660 = vmatpush.msra.mxu0 0.00390625
      %661 = vmatpush.msra.mxu0 0.00390625
      %662 = vmatpush.msra.mxu0 0.00390625
      %663 = vmatpush.msra.mxu0 0.00390625
      %664 = vmatpush.msra.mxu0 0.00390625
      %665 = vmatpush.msra.mxu0 0.00390625
      %666 = vmatpush.msra.mxu0 0.00390625
      %v667 = vand.u32 %v649, 4294901760
      %v668 = vsub.f32 %v649, %v667
      %v669 = vand.u32 %v668, 4294901760
      %v670 = vsub.f32 %v668, %v669
      %v671 = vand.u32 %v670, 4294901760
      %672 = vmatmul.f32.gmra.mxu0 %v671
      %v673 = vpop.f32.mrf.mxu0
      %v674 = vadd.f32 0.0, %v673
      %675 = vdwg.mxu0
      %676 = vmatpush.msra.mxu0 0.0
      %677 = vmatpush.msra.mxu0 0.0
      %678 = vmatpush.msra.mxu0 0.0
      %679 = vmatpush.msra.mxu0 0.0
      %680 = vmatpush.msra.mxu0 0.0
      %681 = vmatpush.msra.mxu0 0.0
      %682 = vmatpush.msra.mxu0 0.0
      %683 = vmatpush.msra.mxu0 0.0
      %684 = vmatpush.msra.mxu0 0.0
      %685 = vmatpush.msra.mxu0 0.0
      %686 = vmatpush.msra.mxu0 0.0
      %687 = vmatpush.msra.mxu0 0.0
      %688 = vmatpush.msra.mxu0 0.0
      %689 = vmatpush.msra.mxu0 0.0
      %690 = vmatpush.msra.mxu0 0.0
      %691 = vmatpush.msra.mxu0 0.0
      %v692 = vand.u32 %v649, 4294901760
      %693 = vmatmul.f32.gmra.mxu0 %v692
      %v694 = vpop.f32.mrf.mxu0
      %v695 = vadd.f32 %v674, %v694
      %696 = vdwg.mxu0
      %697 = vmatpush.msra.mxu0 0.0
      %698 = vmatpush.msra.mxu0 0.0
      %699 = vmatpush.msra.mxu0 0.0
      %700 = vmatpush.msra.mxu0 0.0
      %701 = vmatpush.msra.mxu0 0.0
      %702 = vmatpush.msra.mxu0 0.0
      %703 = vmatpush.msra.mxu0 0.0
      %704 = vmatpush.msra.mxu0 0.0
      %705 = vmatpush.msra.mxu0 0.0
      %706 = vmatpush.msra.mxu0 0.0
      %707 = vmatpush.msra.mxu0 0.0
      %708 = vmatpush.msra.mxu0 0.0
      %709 = vmatpush.msra.mxu0 0.0
      %710 = vmatpush.msra.mxu0 0.0
      %711 = vmatpush.msra.mxu0 0.0
      %712 = vmatpush.msra.mxu0 0.0
      %v713 = vand.u32 %v649, 4294901760
      %v714 = vsub.f32 %v649, %v713
      %715 = vmatmul.f32.gmra.mxu0 %v714
      %v716 = vpop.f32.mrf.mxu0
      %v717 = vadd.f32 %v695, %v716
      %718 = vdwg.mxu0
      %719 = vmatpush.msra.mxu0 0.00390625
      %720 = vmatpush.msra.mxu0 0.00390625
      %721 = vmatpush.msra.mxu0 0.00390625
      %722 = vmatpush.msra.mxu0 0.00390625
      %723 = vmatpush.msra.mxu0 0.00390625
      %724 = vmatpush.msra.mxu0 0.00390625
      %725 = vmatpush.msra.mxu0 0.00390625
      %726 = vmatpush.msra.mxu0 0.00390625
      %727 = vmatpush.msra.mxu0 0.00390625
      %728 = vmatpush.msra.mxu0 0.00390625
      %729 = vmatpush.msra.mxu0 0.00390625
      %730 = vmatpush.msra.mxu0 0.00390625
      %731 = vmatpush.msra.mxu0 0.00390625
      %732 = vmatpush.msra.mxu0 0.00390625
      %733 = vmatpush.msra.mxu0 0.00390625
      %734 = vmatpush.msra.mxu0 0.00390625
      %v735 = vand.u32 %v649, 4294901760
      %v736 = vsub.f32 %v649, %v735
      %v737 = vand.u32 %v736, 4294901760
      %738 = vmatmul.f32.gmra.mxu0 %v737
      %v739 = vpop.f32.mrf.mxu0
      %v740 = vadd.f32 %v717, %v739
      %741 = vdwg.mxu0
      %742 = vmatpush.msra.mxu0 0.0
      %743 = vmatpush.msra.mxu0 0.0
      %744 = vmatpush.msra.mxu0 0.0
      %745 = vmatpush.msra.mxu0 0.0
      %746 = vmatpush.msra.mxu0 0.0
      %747 = vmatpush.msra.mxu0 0.0
      %748 = vmatpush.msra.mxu0 0.0
      %749 = vmatpush.msra.mxu0 0.0
      %750 = vmatpush.msra.mxu0 0.0
      %751 = vmatpush.msra.mxu0 0.0
      %752 = vmatpush.msra.mxu0 0.0
      %753 = vmatpush.msra.mxu0 0.0
      %754 = vmatpush.msra.mxu0 0.0
      %755 = vmatpush.msra.mxu0 0.0
      %756 = vmatpush.msra.mxu0 0.0
      %757 = vmatpush.msra.mxu0 0.0
      %v758 = vand.u32 %v649, 4294901760
      %759 = vmatmul.f32.gmra.mxu0 %v758
      %v760 = vpop.f32.mrf.mxu0
      %v761 = vadd.f32 %v740, %v760
      %762 = vdwg.mxu0
      %763 = vmatpush.msra.mxu0 0.00390625
      %764 = vmatpush.msra.mxu0 0.00390625
      %765 = vmatpush.msra.mxu0 0.00390625
      %766 = vmatpush.msra.mxu0 0.00390625
      %767 = vmatpush.msra.mxu0 0.00390625
      %768 = vmatpush.msra.mxu0 0.00390625
      %769 = vmatpush.msra.mxu0 0.00390625
      %770 = vmatpush.msra.mxu0 0.00390625
      %771 = vmatpush.msra.mxu0 0.00390625
      %772 = vmatpush.msra.mxu0 0.00390625
      %773 = vmatpush.msra.mxu0 0.00390625
      %774 = vmatpush.msra.mxu0 0.00390625
      %775 = vmatpush.msra.mxu0 0.00390625
      %776 = vmatpush.msra.mxu0 0.00390625
      %777 = vmatpush.msra.mxu0 0.00390625
      %778 = vmatpush.msra.mxu0 0.00390625
      %v779 = vand.u32 %v649, 4294901760
      %780 = vmatmul.f32.gmra.mxu0 %v779
      %v781 = vpop.f32.mrf.mxu0
      %v782 = vadd.f32 %v761, %v781
      %783 = vdwg.mxu0
      %784 = vmatpush.msra.mxu0 0.00390625
      %785 = vmatpush.msra.mxu0 0.00390625
      %786 = vmatpush.msra.mxu0 0.00390625
      %787 = vmatpush.msra.mxu0 0.00390625
      %788 = vmatpush.msra.mxu0 0.00390625
      %789 = vmatpush.msra.mxu0 0.00390625
      %790 = vmatpush.msra.mxu0 0.00390625
      %791 = vmatpush.msra.mxu0 0.00390625
      %792 = vmatpush.msra.mxu0 0.00390625
      %793 = vmatpush.msra.mxu0 0.00390625
      %794 = vmatpush.msra.mxu0 0.00390625
      %795 = vmatpush.msra.mxu0 0.00390625
      %796 = vmatpush.msra.mxu0 0.00390625
      %797 = vmatpush.msra.mxu0 0.00390625
      %798 = vmatpush.msra.mxu0 0.00390625
      %799 = vmatpush.msra.mxu0 0.00390625
      %v800 = vand.u32 %v650, 4294901760
      %v801 = vsub.f32 %v650, %v800
      %v802 = vand.u32 %v801, 4294901760
      %v803 = vsub.f32 %v801, %v802
      %v804 = vand.u32 %v803, 4294901760
      %805 = vmatmul.f32.gmra.mxu0 %v804
      %v806 = vpop.f32.mrf.mxu0
      %v807 = vadd.f32 %v782, %v806
      %808 = vdwg.mxu0
      %809 = vmatpush.msra.mxu0 0.0
      %810 = vmatpush.msra.mxu0 0.0
      %811 = vmatpush.msra.mxu0 0.0
      %812 = vmatpush.msra.mxu0 0.0
      %813 = vmatpush.msra.mxu0 0.0
      %814 = vmatpush.msra.mxu0 0.0
      %815 = vmatpush.msra.mxu0 0.0
      %816 = vmatpush.msra.mxu0 0.0
      %817 = vmatpush.msra.mxu0 0.0
      %818 = vmatpush.msra.mxu0 0.0
      %819 = vmatpush.msra.mxu0 0.0
      %820 = vmatpush.msra.mxu0 0.0
      %821 = vmatpush.msra.mxu0 0.0
      %822 = vmatpush.msra.mxu0 0.0
      %823 = vmatpush.msra.mxu0 0.0
      %824 = vmatpush.msra.mxu0 0.0
      %v825 = vand.u32 %v650, 4294901760
      %826 = vmatmul.f32.gmra.mxu0 %v825
      %v827 = vpop.f32.mrf.mxu0
      %v828 = vadd.f32 %v807, %v827
      %829 = vdwg.mxu0
      %830 = vmatpush.msra.mxu0 0.0
      %831 = vmatpush.msra.mxu0 0.0
      %832 = vmatpush.msra.mxu0 0.0
      %833 = vmatpush.msra.mxu0 0.0
      %834 = vmatpush.msra.mxu0 0.0
      %835 = vmatpush.msra.mxu0 0.0
      %836 = vmatpush.msra.mxu0 0.0
      %837 = vmatpush.msra.mxu0 0.0
      %838 = vmatpush.msra.mxu0 0.0
      %839 = vmatpush.msra.mxu0 0.0
      %840 = vmatpush.msra.mxu0 0.0
      %841 = vmatpush.msra.mxu0 0.0
      %842 = vmatpush.msra.mxu0 0.0
      %843 = vmatpush.msra.mxu0 0.0
      %844 = vmatpush.msra.mxu0 0.0
      %845 = vmatpush.msra.mxu0 0.0
      %v846 = vand.u32 %v650, 4294901760
      %v847 = vsub.f32 %v650, %v846
      %848 = vmatmul.f32.gmra.mxu0 %v847
      %v849 = vpop.f32.mrf.mxu0
      %v850 = vadd.f32 %v828, %v849
      %851 = vdwg.mxu0
      %852 = vmatpush.msra.mxu0 0.00390625
      %853 = vmatpush.msra.mxu0 0.00390625
      %854 = vmatpush.msra.mxu0 0.00390625
      %855 = vmatpush.msra.mxu0 0.00390625
      %856 = vmatpush.msra.mxu0 0.00390625
      %857 = vmatpush.msra.mxu0 0.00390625
      %858 = vmatpush.msra.mxu0 0.00390625
      %859 = vmatpush.msra.mxu0 0.00390625
      %860 = vmatpush.msra.mxu0 0.00390625
      %861 = vmatpush.msra.mxu0 0.00390625
      %862 = vmatpush.msra.mxu0 0.00390625
      %863 = vmatpush.msra.mxu0 0.00390625
      %864 = vmatpush.msra.mxu0 0.00390625
      %865 = vmatpush.msra.mxu0 0.00390625
      %866 = vmatpush.msra.mxu0 0.00390625
      %867 = vmatpush.msra.mxu0 0.00390625
      %v868 = vand.u32 %v650, 4294901760
      %v869 = vsub.f32 %v650, %v868
      %v870 = vand.u32 %v869, 4294901760
      %871 = vmatmul.f32.gmra.mxu0 %v870
      %v872 = vpop.f32.mrf.mxu0
      %v873 = vadd.f32 %v850, %v872
      %874 = vdwg.mxu0
      %875 = vmatpush.msra.mxu0 0.0
      %876 = vmatpush.msra.mxu0 0.0
      %877 = vmatpush.msra.mxu0 0.0
      %878 = vmatpush.msra.mxu0 0.0
      %879 = vmatpush.msra.mxu0 0.0
      %880 = vmatpush.msra.mxu0 0.0
      %881 = vmatpush.msra.mxu0 0.0
      %882 = vmatpush.msra.mxu0 0.0
      %883 = vmatpush.msra.mxu0 0.0
      %884 = vmatpush.msra.mxu0 0.0
      %885 = vmatpush.msra.mxu0 0.0
      %886 = vmatpush.msra.mxu0 0.0
      %887 = vmatpush.msra.mxu0 0.0
      %888 = vmatpush.msra.mxu0 0.0
      %889 = vmatpush.msra.mxu0 0.0
      %890 = vmatpush.msra.mxu0 0.0
      %v891 = vand.u32 %v650, 4294901760
      %892 = vmatmul.f32.gmra.mxu0 %v891
      %v893 = vpop.f32.mrf.mxu0
      %v894 = vadd.f32 %v873, %v893
      %895 = vdwg.mxu0
      %896 = vmatpush.msra.mxu0 0.00390625
      %897 = vmatpush.msra.mxu0 0.00390625
      %898 = vmatpush.msra.mxu0 0.00390625
      %899 = vmatpush.msra.mxu0 0.00390625
      %900 = vmatpush.msra.mxu0 0.00390625
      %901 = vmatpush.msra.mxu0 0.00390625
      %902 = vmatpush.msra.mxu0 0.00390625
      %903 = vmatpush.msra.mxu0 0.00390625
      %904 = vmatpush.msra.mxu0 0.00390625
      %905 = vmatpush.msra.mxu0 0.00390625
      %906 = vmatpush.msra.mxu0 0.00390625
      %907 = vmatpush.msra.mxu0 0.00390625
      %908 = vmatpush.msra.mxu0 0.00390625
      %909 = vmatpush.msra.mxu0 0.00390625
      %910 = vmatpush.msra.mxu0 0.00390625
      %911 = vmatpush.msra.mxu0 0.00390625
      %v912 = vand.u32 %v650, 4294901760
      %913 = vmatmul.f32.gmra.mxu0 %v912
      %v914 = vpop.f32.mrf.mxu0
      %v915 = vadd.f32 %v894, %v914
      %916 = vdwg.mxu0
      %v917 = vld [vmem:[%s3] sm:$0xff]
      %v918 = vld [vmem:[%s3 + $0x8] sm:$0x3]
      %v919 = vld [vmem:[%s4] sm:$0xff]
      %v920 = vld [vmem:[%s4 + $0x8] sm:$0x3]
      %vm921 = vcmask 64512
      %v923 = vsel %vm921, %v917, 0
      %v926 = vsel %vm921, %v918, 0
      %928 = vmatpush.msra.mxu0 0.0
      %929 = vmatpush.msra.mxu0 0.0
      %930 = vmatpush.msra.mxu0 0.0
      %931 = vmatpush.msra.mxu0 0.0
      %932 = vmatpush.msra.mxu0 0.0
      %933 = vmatpush.msra.mxu0 0.0
      %934 = vmatpush.msra.mxu0 0.0
      %935 = vmatpush.msra.mxu0 0.0
      %936 = vmatpush.msra.mxu0 0.0
      %937 = vmatpush.msra.mxu0 0.0
      %938 = vmatpush.msra.mxu0 0.0
      %939 = vmatpush.msra.mxu0 0.0
      %940 = vmatpush.msra.mxu0 0.0
      %941 = vmatpush.msra.mxu0 0.0
      %942 = vmatpush.msra.mxu0 0.0
      %v943 = vand.u32 %v915, 4294901760
      %944 = vmatpush.msra.mxu0 %v943
      %v945 = vand.u32 %v923, 4294901760
      %v946 = vsub.f32 %v923, %v945
      %v947 = vand.u32 %v946, 4294901760
      %v948 = vsub.f32 %v946, %v947
      %v949 = vand.u32 %v948, 4294901760
      %950 = vmatmul.f32.gmra.mxu0 %v949
      %v951 = vpop.f32.mrf.mxu0
      %v952 = vadd.f32 %v919, %v951
      %v953 = vand.u32 %v926, 4294901760
      %v954 = vsub.f32 %v926, %v953
      %v955 = vand.u32 %v954, 4294901760
      %v956 = vsub.f32 %v954, %v955
      %v957 = vand.u32 %v956, 4294901760
      %958 = vmatmul.f32.gmra.mxu0 %v957
      %v959 = vpop.f32.mrf.mxu0
      %v960 = vadd.f32 %v920, %v959
      %961 = vdwg.mxu0
      %962 = vmatpush.msra.mxu0 0.0
      %963 = vmatpush.msra.mxu0 0.0
      %964 = vmatpush.msra.mxu0 0.0
      %965 = vmatpush.msra.mxu0 0.0
      %966 = vmatpush.msra.mxu0 0.0
      %967 = vmatpush.msra.mxu0 0.0
      %968 = vmatpush.msra.mxu0 0.0
      %969 = vmatpush.msra.mxu0 0.0
      %970 = vmatpush.msra.mxu0 0.0
      %971 = vmatpush.msra.mxu0 0.0
      %972 = vmatpush.msra.mxu0 0.0
      %973 = vmatpush.msra.mxu0 0.0
      %974 = vmatpush.msra.mxu0 0.0
      %975 = vmatpush.msra.mxu0 0.0
      %976 = vmatpush.msra.mxu0 0.0
      %v977 = vand.u32 %v915, 4294901760
      %v978 = vsub.f32 %v915, %v977
      %v979 = vand.u32 %v978, 4294901760
      %v980 = vsub.f32 %v978, %v979
      %v981 = vand.u32 %v980, 4294901760
      %982 = vmatpush.msra.mxu0 %v981
      %v983 = vand.u32 %v923, 4294901760
      %984 = vmatmul.f32.gmra.mxu0 %v983
      %v985 = vpop.f32.mrf.mxu0
      %v986 = vadd.f32 %v952, %v985
      %v987 = vand.u32 %v926, 4294901760
      %988 = vmatmul.f32.gmra.mxu0 %v987
      %v989 = vpop.f32.mrf.mxu0
      %v990 = vadd.f32 %v960, %v989
      %991 = vdwg.mxu0
      %992 = vmatpush.msra.mxu0 0.0
      %993 = vmatpush.msra.mxu0 0.0
      %994 = vmatpush.msra.mxu0 0.0
      %995 = vmatpush.msra.mxu0 0.0
      %996 = vmatpush.msra.mxu0 0.0
      %997 = vmatpush.msra.mxu0 0.0
      %998 = vmatpush.msra.mxu0 0.0
      %999 = vmatpush.msra.mxu0 0.0
      %1000 = vmatpush.msra.mxu0 0.0
      %1001 = vmatpush.msra.mxu0 0.0
      %1002 = vmatpush.msra.mxu0 0.0
      %1003 = vmatpush.msra.mxu0 0.0
      %1004 = vmatpush.msra.mxu0 0.0
      %1005 = vmatpush.msra.mxu0 0.0
      %1006 = vmatpush.msra.mxu0 0.0
      %v1007 = vand.u32 %v915, 4294901760
      %v1008 = vsub.f32 %v915, %v1007
      %1009 = vmatpush.msra.mxu0 %v1008
      %v1010 = vand.u32 %v923, 4294901760
      %v1011 = vsub.f32 %v923, %v1010
      %1012 = vmatmul.f32.gmra.mxu0 %v1011
      %v1013 = vpop.f32.mrf.mxu0
      %v1014 = vadd.f32 %v986, %v1013
      %v1015 = vand.u32 %v926, 4294901760
      %v1016 = vsub.f32 %v926, %v1015
      %1017 = vmatmul.f32.gmra.mxu0 %v1016
      %v1018 = vpop.f32.mrf.mxu0
      %v1019 = vadd.f32 %v990, %v1018
      %1020 = vdwg.mxu0
      %1021 = vmatpush.msra.mxu0 0.0
      %1022 = vmatpush.msra.mxu0 0.0
      %1023 = vmatpush.msra.mxu0 0.0
      %1024 = vmatpush.msra.mxu0 0.0
      %1025 = vmatpush.msra.mxu0 0.0
      %1026 = vmatpush.msra.mxu0 0.0
      %1027 = vmatpush.msra.mxu0 0.0
      %1028 = vmatpush.msra.mxu0 0.0
      %1029 = vmatpush.msra.mxu0 0.0
      %1030 = vmatpush.msra.mxu0 0.0
      %1031 = vmatpush.msra.mxu0 0.0
      %1032 = vmatpush.msra.mxu0 0.0
      %1033 = vmatpush.msra.mxu0 0.0
      %1034 = vmatpush.msra.mxu0 0.0
      %1035 = vmatpush.msra.mxu0 0.0
      %v1036 = vand.u32 %v915, 4294901760
      %1037 = vmatpush.msra.mxu0 %v1036
      %v1038 = vand.u32 %v923, 4294901760
      %v1039 = vsub.f32 %v923, %v1038
      %v1040 = vand.u32 %v1039, 4294901760
      %1041 = vmatmul.f32.gmra.mxu0 %v1040
      %v1042 = vpop.f32.mrf.mxu0
      %v1043 = vadd.f32 %v1014, %v1042
      %v1044 = vand.u32 %v926, 4294901760
      %v1045 = vsub.f32 %v926, %v1044
      %v1046 = vand.u32 %v1045, 4294901760
      %1047 = vmatmul.f32.gmra.mxu0 %v1046
      %v1048 = vpop.f32.mrf.mxu0
      %v1049 = vadd.f32 %v1019, %v1048
      %1050 = vdwg.mxu0
      %1051 = vmatpush.msra.mxu0 0.0
      %1052 = vmatpush.msra.mxu0 0.0
      %1053 = vmatpush.msra.mxu0 0.0
      %1054 = vmatpush.msra.mxu0 0.0
      %1055 = vmatpush.msra.mxu0 0.0
      %1056 = vmatpush.msra.mxu0 0.0
      %1057 = vmatpush.msra.mxu0 0.0
      %1058 = vmatpush.msra.mxu0 0.0
      %1059 = vmatpush.msra.mxu0 0.0
      %1060 = vmatpush.msra.mxu0 0.0
      %1061 = vmatpush.msra.mxu0 0.0
      %1062 = vmatpush.msra.mxu0 0.0
      %1063 = vmatpush.msra.mxu0 0.0
      %1064 = vmatpush.msra.mxu0 0.0
      %1065 = vmatpush.msra.mxu0 0.0
      %v1066 = vand.u32 %v915, 4294901760
      %v1067 = vsub.f32 %v915, %v1066
      %v1068 = vand.u32 %v1067, 4294901760
      %1069 = vmatpush.msra.mxu0 %v1068
      %v1070 = vand.u32 %v923, 4294901760
      %1071 = vmatmul.f32.gmra.mxu0 %v1070
      %v1072 = vpop.f32.mrf.mxu0
      %v1073 = vadd.f32 %v1043, %v1072
      %v1074 = vand.u32 %v926, 4294901760
      %1075 = vmatmul.f32.gmra.mxu0 %v1074
      %v1076 = vpop.f32.mrf.mxu0
      %v1077 = vadd.f32 %v1049, %v1076
      %1078 = vdwg.mxu0
      %1079 = vmatpush.msra.mxu0 0.0
      %1080 = vmatpush.msra.mxu0 0.0
      %1081 = vmatpush.msra.mxu0 0.0
      %1082 = vmatpush.msra.mxu0 0.0
      %1083 = vmatpush.msra.mxu0 0.0
      %1084 = vmatpush.msra.mxu0 0.0
      %1085 = vmatpush.msra.mxu0 0.0
      %1086 = vmatpush.msra.mxu0 0.0
      %1087 = vmatpush.msra.mxu0 0.0
      %1088 = vmatpush.msra.mxu0 0.0
      %1089 = vmatpush.msra.mxu0 0.0
      %1090 = vmatpush.msra.mxu0 0.0
      %1091 = vmatpush.msra.mxu0 0.0
      %1092 = vmatpush.msra.mxu0 0.0
      %1093 = vmatpush.msra.mxu0 0.0
      %v1094 = vand.u32 %v915, 4294901760
      %1095 = vmatpush.msra.mxu0 %v1094
      %v1096 = vand.u32 %v923, 4294901760
      %1097 = vmatmul.f32.gmra.mxu0 %v1096
      %v1098 = vpop.f32.mrf.mxu0
      %v1099 = vadd.f32 %v1073, %v1098
      %v1100 = vand.u32 %v926, 4294901760
      %1101 = vmatmul.f32.gmra.mxu0 %v1100
      %v1102 = vpop.f32.mrf.mxu0
      %v1103 = vadd.f32 %v1077, %v1102
      %1104 = vdwg.mxu0
      %vm1105 = vcmask 7168
      %1106 = vst.msk [vmem:[%s224] sm:$0xff] %vm1105, %v1099
      %vm1107 = vcmask 1024
      %1108 = vst.msk [vmem:[%s224 + $0x8] sm:$0x3] %vm1107, %v1103
      %p1109 = scmp.lt.s32.totalorder %s16, 1
      %s1110 = scalar_select %p1109, %s16, 1
      %s1111 = smul.addr %s1110, 2
      %s1112 = smul.addr %s1111, 8
      %s1113 = scalar_lea.vmem %s5, %s1112
      // Predicated region
      $region41: #{combined_forward.1} parent=39 // pred_check
        %p1114 = pneg %p144
      $region42: #{combined_forward.1} parent=39 // pred_check_branch
        %1116 = sbr.rel (%p1114) target = $region44
      $region43: #{combined_forward.1} parent=39 // pred_region
        _
      $region44: #{combined_forward.1} parent=39 // pred_fallthru
        _
    $region40: #{combined_forward.1} parent=5 // pred_fallthru
      _
    %p1117 = scmp.le.s32.totalorder 2, %s11
    // Predicated region
    $region45: #{combined_forward.1} parent=5 // pred_check
      %p1118 = pneg %p1117
    $region46: #{combined_forward.1} parent=5 // pred_check_branch
      %1120 = sbr.rel (%p1118) target = $region48
    $region47: #{combined_forward.1} parent=5 // pred_region
      %s1121 = ssub.s32 %s11, 2
      // Predicated region
      $region49: #{combined_forward.1} parent=47 // pred_check
        %p1122 = pneg %p150
      $region50: #{combined_forward.1} parent=47 // pred_check_branch
        %1124 = sbr.rel (%p1122) target = $region52
      $region51: #{combined_forward.1} parent=47 // pred_region
        %p1125 = scmp.lt.s32.totalorder %s17, 1
        %s1126 = scalar_select %p1125, %s17, 1
        %s1127 = smul.addr %s1126, 2
        %s1128 = smul.addr %s1127, 8
        %s1129 = scalar_lea.vmem %s5, %s1128
      $region52: #{combined_forward.1} parent=47 // pred_fallthru
        _
    $region48: #{combined_forward.1} parent=5 // pred_fallthru
      _
  $region6: #{combined_forward.1} parent=0 // loop_footer
    %s15 = sadd.s32 1, %s11
  $region7: #{combined_forward.1} parent=0 // loop_footer_branch
    %10 = sbr.rel target = $region3
  $region8: #{combined_forward.1} parent=0 // loop_exit
    _

</llo_original>
